<compile_context>
chip_gen: v7x
topology: tpu7x:2x2x1
jax: 0.10.0
libtpu: 0.0.40
codegen_flags: <defaults>
</compile_context>

<pallas_src>
import functools

import jax
import jax.numpy as jnp
from jax.experimental import pallas as pl
from jax.experimental.pallas import tpu as pltpu

PAD1 = ((1, 1), (1, 1), (1, 1))
PAD0 = ((0, 0), (0, 0), (0, 0))


def _vmem_limit_bytes():
    cap = 64 * 1024 * 1024                       # conservative default (v7x: 64 MiB / TC)
    try:
        cap = int(pltpu.get_tpu_info().vmem_capacity_bytes)
    except Exception:
        pass
    cap = max(cap, 32 * 1024 * 1024)
    return min(int(cap * 0.65), cap - (16 << 20))


VMEM_LIMIT = _vmem_limit_bytes()                 # ~41 MiB on v7x, ~83 MiB on v5e/v6e
FUSE_BUDGET = int(VMEM_LIMIT * 0.9)              # resident-block budget incl. double buffers


def _pick_div(n, target, mult=1):
    """Largest divisor of n that is <= target, preferring multiples of `mult`.
    Returns n itself when n <= target (full-dim blocks are always layout-legal)."""
    target = int(max(1, min(n, target)))
    if n <= target:
        return n
    divs = [d for d in range(1, target + 1) if n % d == 0]
    pref = [d for d in divs if d % mult == 0]
    return (pref or divs)[-1]


# ------------------------------ Pallas kernel bodies --------------------------------

def _instnorm_relu_f32(y, group):
    # InstanceNorm3d (no affine, biased var, eps=1e-5) + ReLU.  group>1 is used by the
    # sub-pixel deconv: the 8 parity rows of one output channel jointly form that channel's
    # full spatial extent, and instance-norm statistics are order-invariant over space.
    if group == 1:
        mu = jnp.mean(y, axis=-1, keepdims=True)
        yc = y - mu
        var = jnp.mean(yc * yc, axis=-1, keepdims=True)
        return jnp.maximum(yc * jax.lax.rsqrt(var + 1e-5), 0.0)
    r, m = y.shape
    yg = y.reshape(r // group, group, m)          # leading-dim split: layout-preserving
    inv = 1.0 / float(group * m)
    mu = jnp.sum(jnp.sum(yg, axis=2, keepdims=True), axis=1, keepdims=True) * inv
    yc = yg - mu
    var = jnp.sum(jnp.sum(yc * yc, axis=2, keepdims=True), axis=1, keepdims=True) * inv
    return jnp.maximum(yc * jax.lax.rsqrt(var + 1e-5), 0.0).reshape(r, m)


def _gemm_norm_kernel(x_ref, w_ref, o_ref, *, group):
    # x: (K, M) bf16, w: (ct, K) bf16 -> o: (ct, M) bf16 (norm+relu fused, no bias)
    y = jnp.dot(w_ref[...], x_ref[...], preferred_element_type=jnp.float32)
    o_ref[...] = _instnorm_relu_f32(y, group).astype(o_ref.dtype)


def _gemm_norm_proj_kernel(x_ref, w_ref, wo_ref, bo_ref, o_ref, *, group):
    # conv GEMM -> InstanceNorm+ReLU -> 1x1x1 projection -> +bias -> sigmoid, in one pass
    y = jnp.dot(w_ref[...], x_ref[...], preferred_element_type=jnp.float32)
    y = _instnorm_relu_f32(y, group)
    z = jnp.dot(wo_ref[...], y.astype(jnp.bfloat16),
                preferred_element_type=jnp.float32) + bo_ref[...]
    o_ref[...] = 0.5 * (jnp.tanh(0.5 * z) + 1.0)          # sigmoid via EUP tanh (no inf)


def _gemm_plain_kernel(x_ref, w_ref, o_ref):
    o_ref[...] = jnp.dot(w_ref[...], x_ref[...],
                         preferred_element_type=jnp.float32).astype(o_ref.dtype)


def _gemm_bias_sigmoid_kernel(x_ref, w_ref, b_ref, o_ref):
    y = jnp.dot(w_ref[...], x_ref[...], preferred_element_type=jnp.float32) + b_ref[...]
    o_ref[...] = (0.5 * (jnp.tanh(0.5 * y) + 1.0)).astype(o_ref.dtype)


def _instnorm_relu_rows_kernel(x_ref, o_ref):
    x = x_ref[...].astype(jnp.float32)
    mu = jnp.mean(x, axis=-1, keepdims=True)
    xc = x - mu
    var = jnp.mean(xc * xc, axis=-1, keepdims=True)
    o_ref[...] = jnp.maximum(xc * jax.lax.rsqrt(var + 1e-5), 0.0).astype(o_ref.dtype)


def _max8_kernel(*refs):
    o_ref = refs[-1]
    m = refs[0][...]
    for r in refs[1:-1]:
        m = jnp.maximum(m, r[...])
    o_ref[...] = m


# ------------------------------ Pallas call wrappers --------------------------------

def _fused_bytes(K, M, ct, out_rows, out_bytes):
    # x block (K,M) bf16 x2 buffers + weight (ct,K) bf16 x2 + out (out_rows,M) x2 + f32 temps
    return 4 * K * M + 4 * ct * K + 2 * out_rows * M * out_bytes + 8 * ct * M + (1 << 20)


def _pick_cout_tile(Ce, K, M, group):
    cands = sorted({d for d in range(group, Ce + 1, group)
                    if Ce % d == 0 and (d % 8 == 0 or d == Ce)})
    fit = [d for d in cands if _fused_bytes(K, M, d, d, 2) <= FUSE_BUDGET]
    return fit[-1] if fit else None


def pallas_gemm_norm(xcol, wmat, *, group=1, proj=None):
    """W @ Xcol with a fused InstanceNorm+ReLU epilogue (full spatial M per block).
    Returns None when the fused blocks do not fit the VMEM budget (caller falls back)."""
    N, K, M = xcol.shape
    Ce = wmat.shape[0]
    if proj is None:
        ct = _pick_cout_tile(Ce, K, M, group)
        if ct is None:
            return None
        kern = functools.partial(_gemm_norm_kernel, group=group)
        return pl.pallas_call(
            kern,
            out_shape=jax.ShapeDtypeStruct((N, Ce, M), jnp.bfloat16),
            grid=(N, Ce // ct),
            in_specs=[pl.BlockSpec((None, K, M), lambda n, c: (n, 0, 0)),
                      pl.BlockSpec((ct, K), lambda n, c: (c, 0))],
            out_specs=pl.BlockSpec((None, ct, M), lambda n, c: (n, c, 0)),
            compiler_params=pltpu.CompilerParams(
                dimension_semantics=("parallel", "parallel"),
                vmem_limit_bytes=VMEM_LIMIT),
        )(xcol, wmat)
    wout, bout = proj
    Po = wout.shape[0]
    if _fused_bytes(K, M, Ce, Po, 4) > FUSE_BUDGET:
        return None
    kern = functools.partial(_gemm_norm_proj_kernel, group=group)
    return pl.pallas_call(
        kern,
        out_shape=jax.ShapeDtypeStruct((N, Po, M), jnp.float32),
        grid=(N,),
        in_specs=[pl.BlockSpec((None, K, M), lambda n: (n, 0, 0)),
                  pl.BlockSpec((Ce, K), lambda n: (0, 0)),
                  pl.BlockSpec((Po, Ce), lambda n: (0, 0)),
                  pl.BlockSpec((Po, 1), lambda n: (0, 0))],
        out_specs=pl.BlockSpec((None, Po, M), lambda n: (n, 0, 0)),
        compiler_params=pltpu.CompilerParams(
            dimension_semantics=("parallel",),
            vmem_limit_bytes=VMEM_LIMIT),
    )(xcol, wmat, wout.astype(jnp.bfloat16), bout.reshape(Po, 1).astype(jnp.float32))


def pallas_gemm_plain(xcol, wmat, out_dtype=jnp.bfloat16, bias=None, sigmoid=False):
    N, K, M = xcol.shape
    Ce = wmat.shape[0]
    ob = jnp.dtype(out_dtype).itemsize
    fixed = 4 * Ce * K + (1 << 20)
    denom = 4 * K + Ce * (2 * ob + 4)
    tm_cap = max(128, (FUSE_BUDGET - fixed) // denom)
    tm = _pick_div(M, min(tm_cap, 16384), 128)
    if bias is not None and not sigmoid:
        raise NotImplementedError("bias without sigmoid epilogue is unused in this network")
    if sigmoid:
        b = bias if bias is not None else jnp.zeros((Ce,), jnp.float32)
        extra_in = [b.reshape(Ce, 1).astype(jnp.float32)]
        extra_specs = [pl.BlockSpec((Ce, 1), lambda n, m: (0, 0))]
        kern = _gemm_bias_sigmoid_kernel
    else:
        extra_in, extra_specs = [], []
        kern = _gemm_plain_kernel
    return pl.pallas_call(
        kern,
        out_shape=jax.ShapeDtypeStruct((N, Ce, M), out_dtype),
        grid=(N, M // tm),
        in_specs=[pl.BlockSpec((None, K, tm), lambda n, m: (n, 0, m)),
                  pl.BlockSpec((Ce, K), lambda n, m: (0, 0))] + extra_specs,
        out_specs=pl.BlockSpec((None, Ce, tm), lambda n, m: (n, 0, m)),
        compiler_params=pltpu.CompilerParams(
            dimension_semantics=("parallel", "parallel"),
            vmem_limit_bytes=VMEM_LIMIT),
    )(xcol, wmat, *extra_in)


def pallas_instnorm_relu_rows(x2d):
    # rows = independent norm instances, cols = the (flattened) spatial extent
    R, M = x2d.shape
    rt_cap = max(1, FUSE_BUDGET // (12 * M))
    rt = _pick_div(R, min(256, rt_cap), 8)
    return pl.pallas_call(
        _instnorm_relu_rows_kernel,
        out_shape=jax.ShapeDtypeStruct((R, M), jnp.bfloat16),
        grid=(R // rt,),
        in_specs=[pl.BlockSpec((rt, M), lambda i: (i, 0))],
        out_specs=pl.BlockSpec((rt, M), lambda i: (i, 0)),
        compiler_params=pltpu.CompilerParams(dimension_semantics=("parallel",),
                                             vmem_limit_bytes=VMEM_LIMIT),
    )(x2d)


def pallas_maxpool2(x):
    # MaxPool3d(kernel=2, stride=2): 8 parity slices passed as 8 separate pallas inputs
    # (no extra (8, R, Mo) stack pass) + an 8-way elementwise max, lane-dense output.
    N, C, D, H, W = x.shape
    Do, Ho, Wo = D // 2, H // 2, W // 2
    R, Mo = N * C, Do * Ho * Wo
    parts = [x[:, :, i::2, j::2, k::2].reshape(R, Mo)
             for i in (0, 1) for j in (0, 1) for k in (0, 1)]
    tmo = _pick_div(Mo, 2048, 128)
    rt_cap = max(8, FUSE_BUDGET // (36 * tmo))
    rt = _pick_div(R, min(256, rt_cap), 8)
    spec = pl.BlockSpec((rt, tmo), lambda i, j: (i, j))
    out = pl.pallas_call(
        _max8_kernel,
        out_shape=jax.ShapeDtypeStruct((R, Mo), x.dtype),
        grid=(R // rt, Mo // tmo),
        in_specs=[spec] * 8,
        out_specs=spec,
        compiler_params=pltpu.CompilerParams(dimension_semantics=("parallel", "parallel"),
                                             vmem_limit_bytes=VMEM_LIMIT),
    )(*parts)
    return out.reshape(N, C, Do, Ho, Wo)


# --------------------------- conv glue (XLA-level im2col) ----------------------------

def _im2col(x, ksize, pads):
    # x: (N, C, D, H, W) bf16, stride 1 -> (N, C*kd*kh*kw, Do*Ho*Wo); K order = (c, dz, dy, dx)
    # TODO(synk): stream kernel taps straight from the padded activation inside the GEMM
    # (manual DMA of overlapping flat windows) to remove this K-expanded HBM intermediate.
    N, C, D, H, W = x.shape
    kd, kh, kw = ksize
    (pdl, pdr), (phl, phr), (pwl, pwr) = pads
    Do = D + pdl + pdr - kd + 1
    Ho = H + phl + phr - kh + 1
    Wo = W + pwl + pwr - kw + 1
    xp = jnp.pad(x, ((0, 0), (0, 0), (pdl, pdr), (phl, phr), (pwl, pwr)))
    taps = [xp[:, :, dz:dz + Do, dy:dy + Ho, dx:dx + Wo].reshape(N, C, Do * Ho * Wo)
            for dz in range(kd) for dy in range(kh) for dx in range(kw)]
    xcol = jnp.stack(taps, axis=2).reshape(N, C * kd * kh * kw, Do * Ho * Wo)
    return xcol, (Do, Ho, Wo)


def conv3d(x, weight, pads, *, bias=None, fuse_norm=False, norm_group=1, proj=None,
           sigmoid=False, out_dtype=jnp.bfloat16):
    """Conv3d (stride 1) as per-sample GEMMs with fused epilogues.
    weight: (Cout, Cin, kd, kh, kw).  fuse_norm => bias must be None (cancelled by the norm).
    proj=(w_1x1, b_1x1) additionally fuses a 1x1x1 conv + bias + sigmoid after the norm."""
    Cout, Cin, kd, kh, kw = weight.shape
    N = x.shape[0]
    xcol, (Do, Ho, Wo) = _im2col(x.astype(jnp.bfloat16), (kd, kh, kw), pads)
    K, M = Cin * kd * kh * kw, Do * Ho * Wo
    wmat = weight.reshape(Cout, K).astype(jnp.bfloat16)

    if fuse_norm:
        assert bias is None, "bias is redundant before InstanceNorm"
        pw = None if proj is None else (proj[0].reshape(proj[0].shape[0], Cout), proj[1])
        y = pallas_gemm_norm(xcol, wmat, group=norm_group, proj=pw)
        if y is not None:
            co = Cout if proj is None else proj[0].shape[0]
            return y.reshape(N, co, Do, Ho, Wo)
        # VMEM fallback: un-fused GEMM (bf16) + standalone norm over (group*M)-length rows.
        y = pallas_gemm_plain(xcol, wmat, jnp.bfloat16)
        y = pallas_instnorm_relu_rows(y.reshape(N * (Cout // norm_group), norm_group * M))
        y = y.reshape(N, Cout, Do, Ho, Wo)
        if proj is not None:
            po = proj[0].shape[0]
            return conv3d(y, proj[0].reshape(po, Cout, 1, 1, 1), PAD0, bias=proj[1],
                          sigmoid=True, out_dtype=jnp.float32)
        return y

    y = pallas_gemm_plain(xcol, wmat, out_dtype, bias=bias, sigmoid=sigmoid)
    return y.reshape(N, Cout, Do, Ho, Wo)


# ------------------------- ConvTranspose3d(k=4, s=2, p=1) ----------------------------

def _deconv_fused_weight(weight):
    """ConvTranspose3d(k=4,s=2,p=1) weight (Cin, Cout, 4,4,4) -> ONE 3x3x3 conv weight
    (Cout*8, Cin, 3, 3, 3) applied to the 1-padded input, producing all 8 output parities
    at once (sub-pixel decomposition, row index = co*8 + (pd*4 + ph*2 + pw)).
    Per dim: parity p uses im2col taps t in {p, p+1} with kernel value W[3 - 2*(t-p) - p]."""
    Cin, Cout = weight.shape[:2]
    w = jnp.transpose(weight, (1, 0, 2, 3, 4))          # (Cout, Cin, 4, 4, 4)
    blocks = []
    for pd in (0, 1):
        for ph in (0, 1):
            for pw_ in (0, 1):
                blk = jnp.zeros((Cout, Cin, 3, 3, 3), weight.dtype)
                for td in (0, 1):
                    for th in (0, 1):
                        for tw in (0, 1):
                            blk = blk.at[:, :, pd + td, ph + th, pw_ + tw].set(
                                w[:, :, 3 - 2 * td - pd, 3 - 2 * th - ph, 3 - 2 * tw - pw_])
                blocks.append(blk)
    return jnp.stack(blocks, axis=1).reshape(Cout * 8, Cin, 3, 3, 3)


def _interleave_parity(y):
    # (N, Cout*8, D, H, W) parity-major -> (N, Cout, 2D, 2H, 2W)
    N, Ce, D, H, W = y.shape
    Co = Ce // 8
    y = y.reshape(N, Co, 2, 2, 2, D, H, W)
    return jnp.transpose(y, (0, 1, 5, 2, 6, 3, 7, 4)).reshape(N, Co, 2 * D, 2 * H, 2 * W)


def up_block(x, p):
    # ConvTranspose3d + InstanceNorm3d + ReLU: one fused GEMM with 8*Cout MXU output rows,
    # norm over each channel's 8 parity rows (order-invariant), bias dropped (cancelled by
    # the norm), single interleave transpose at the end (no stride-2 scatter passes).
    y = conv3d(x, _deconv_fused_weight(p[0]), PAD1, fuse_norm=True, norm_group=8)
    return _interleave_parity(y)


# --------------------------------- parameters ----------------------------------------

def _init_conv(key, cout, cin, k):
    kw_, kb_ = jax.random.split(key)
    scale = 1.0 / jnp.sqrt(cin * k ** 3)
    w = jax.random.uniform(kw_, (cout, cin, k, k, k), jnp.float32, -scale, scale)
    b = jax.random.uniform(kb_, (cout,), jnp.float32, -scale, scale)
    return w, b


def _init_deconv(key, cin, cout, k):
    kw_, kb_ = jax.random.split(key)
    scale = 1.0 / jnp.sqrt(cin * k ** 3)
    w = jax.random.uniform(kw_, (cin, cout, k, k, k), jnp.float32, -scale, scale)
    b = jax.random.uniform(kb_, (cout,), jnp.float32, -scale, scale)
    return w, b


def init_params(key, in_ch, out_ch, feat):
    ks = jax.random.split(key, 13)
    p = {}
    p['c1a'] = _init_conv(ks[0], feat, in_ch, 3)
    p['c1b'] = _init_conv(ks[1], feat, feat, 3)
    p['c2a'] = _init_conv(ks[2], feat * 2, feat, 3)
    p['c2b'] = _init_conv(ks[3], feat * 2, feat * 2, 3)
    p['c3a'] = _init_conv(ks[4], feat * 4, feat * 2, 3)
    p['c3b'] = _init_conv(ks[5], feat * 4, feat * 4, 3)
    p['u1'] = _init_deconv(ks[6], feat * 4, feat * 2, 4)
    p['c4a'] = _init_conv(ks[7], feat * 2, feat * 4, 3)
    p['c4b'] = _init_conv(ks[8], feat * 2, feat * 2, 3)
    p['u2'] = _init_deconv(ks[9], feat * 2, feat, 4)
    p['c5a'] = _init_conv(ks[10], feat, feat * 2, 3)
    p['c5b'] = _init_conv(ks[11], feat, feat, 3)
    p['out'] = _init_conv(ks[12], out_ch, feat, 1)
    return p


# ----------------------------------- forward -----------------------------------------

def psf_blur(x, PSF, num_views):
    # set_kernel_weights: per-view PSF normalized to sum 1, zero bias, symmetric (k-1)//2 pad.
    # All views batched into ONE conv (weight (num_views, 1, kd, kh, kw)); valid only for a
    # single-channel input, matching the PyTorch PSF_conv construction (out_channels == 1).
    if x.shape[1] != 1:
        raise NotImplementedError("PSF path requires a single-channel input (out_channels == 1)")
    psf = PSF[0, :num_views]
    psf = psf / jnp.sum(psf, axis=(1, 2, 3), keepdims=True)
    V, kd, kh, kw = psf.shape
    w = psf[:, None, :, :, :].astype(jnp.float32)
    pads = tuple(((k - 1) // 2, (k - 1) // 2) for k in (kd, kh, kw))
    return conv3d(x, w, pads, out_dtype=jnp.float32)


def generator_forward(params, img, PSF, direction='BSB', num_views=4):
    def conv_block(x, pa, pb):
        # conv biases are dropped: they are exactly cancelled by the InstanceNorm mean.
        x = conv3d(x, pa[0], PAD1, fuse_norm=True)
        return conv3d(x, pb[0], PAD1, fuse_norm=True)

    def unet(x):
        c1 = conv_block(x, params['c1a'], params['c1b'])
        d1 = pallas_maxpool2(c1)
        c2 = conv_block(d1, params['c2a'], params['c2b'])
        d2 = pallas_maxpool2(c2)
        c3 = conv_block(d2, params['c3a'], params['c3b'])
        u1 = up_block(c3, params['u1'])
        c4 = conv_block(jnp.concatenate((u1, c2), axis=1), params['c4a'], params['c4b'])
        u2 = up_block(c4, params['u2'])
        c5a = conv3d(jnp.concatenate((u2, c1), axis=1), params['c5a'][0], PAD1, fuse_norm=True)
        # c5b conv + InstanceNorm + ReLU + 1x1x1 'out' conv + bias + sigmoid in one GEMM
        return conv3d(c5a, params['c5b'][0], PAD1, fuse_norm=True,
                      proj=(params['out'][0], params['out'][1]))

    if direction == 'BSB':
        sharp_pred = unet(img)
        blurred = None if PSF is None else psf_blur(sharp_pred, PSF, num_views)
    elif direction == 'SBS':
        blurred = None if PSF is None else psf_blur(img, PSF, num_views)
        sharp_pred = unet(blurred)
    else:
        raise ValueError(direction)
    return sharp_pred, blurred


# ------------------------------------- main -------------------------------------------

if __name__ == "__main__":
    # module-consistent small shapes: batch=2, in_channels=4, out_channels=1,
    # feat_channels=8, num_views=4, spatial 8x8x8, PSF 3x3x3
    in_ch, out_ch, feat, num_views = 4, 1, 8, 4
    params = init_params(jax.random.PRNGKey(0), in_ch, out_ch, feat)
    kimg, kpsf, kchk = jax.random.split(jax.random.PRNGKey(0), 3)
    img = jax.random.uniform(kimg, (2, in_ch, 8, 8, 8), jnp.float32)
    PSF = jax.random.uniform(kpsf, (1, num_views, 3, 3, 3), jnp.float32) + 0.1

    # Numerical self-check of the fused sub-pixel ConvTranspose3d(k=4,s=2,p=1) decomposition
    # against XLA's fractionally-strided convolution (same bf16 operands, f32 accumulation).
    def _deconv_ref(x, w):
        rhs = jnp.flip(w, axis=(2, 3, 4)).transpose(1, 0, 2, 3, 4)    # (Cout, Cin, 4,4,4)
        return jax.lax.conv_general_dilated(
            x.astype(jnp.bfloat16), rhs.astype(jnp.bfloat16),
            window_strides=(1, 1, 1), padding=[(2, 2)] * 3, lhs_dilation=(2, 2, 2),
            dimension_numbers=('NCDHW', 'OIDHW', 'NCDHW'),
            preferred_element_type=jnp.float32)

    xc = jax.random.uniform(kchk, (2, feat * 4, 2, 2, 2), jnp.float32)
    wdc = params['u1'][0]
    got = jax.jit(lambda x, w: _interleave_parity(
        conv3d(x, _deconv_fused_weight(w), PAD1, out_dtype=jnp.float32)))(xc, wdc)
    ref = jax.jit(_deconv_ref)(xc, wdc)
    jax.block_until_ready((got, ref))
    assert got.shape == ref.shape, (got.shape, ref.shape)
    err = float(jnp.max(jnp.abs(got - ref)))
    assert err < 5e-2, f"deconv sub-pixel decomposition mismatch: max abs err = {err}"

    fwd = jax.jit(generator_forward, static_argnames=('direction', 'num_views'))
    sharp, blurred = fwd(params, img, PSF, direction='BSB', num_views=num_views)
    jax.block_until_ready((sharp, blurred))
    assert sharp.shape == (2, out_ch, 8, 8, 8), sharp.shape
    assert blurred.shape == (2, num_views * out_ch, 8, 8, 8), blurred.shape
    assert bool(jnp.all(jnp.isfinite(sharp))) and bool(jnp.all(jnp.isfinite(blurred)))
    print("KERNEL_OK")
</pallas_src>

<mosaic_0001>
module attributes {stable_mosaic.version = 11 : i64} {
  func.func @_gemm_plain_kernel(%arg0: i32, %arg1: i32, %arg2: memref<1x864x8xbf16, #tpu.memory_space<vmem>>, %arg3: memref<128x864xbf16, #tpu.memory_space<vmem>>, %arg4: memref<1x128x8xf32, #tpu.memory_space<vmem>>) attributes {dimension_semantics = [#tpu.dimension_semantics<parallel>, #tpu.dimension_semantics<parallel>], iteration_bounds = array<i64: 2, 1>, scalar_prefetch = 0 : i64, scratch_operands = 0 : i64, tpu.core_type = #tpu.core_type<tc>, window_params = [{transform_indices = @transform_0, window_bounds = array<i64: 1, 864, 8>}, {pipeline_mode = #tpu.pipeline_mode<synchronous>, transform_indices = @transform_1, window_bounds = array<i64: 128, 864>}, {transform_indices = @transform_2, window_bounds = array<i64: 1, 128, 8>}]} {
    %c0 = arith.constant 0 : index
    %c0_0 = arith.constant 0 : index
    %0 = vector.load %arg3[%c0, %c0_0] : memref<128x864xbf16, #tpu.memory_space<vmem>>, vector<128x864xbf16>
    %c0_1 = arith.constant 0 : index
    %c0_2 = arith.constant 0 : index
    %c0_3 = arith.constant 0 : index
    %1 = vector.load %arg2[%c0_1, %c0_2, %c0_3] : memref<1x864x8xbf16, #tpu.memory_space<vmem>>, vector<1x864x8xbf16>
    %2 = vector.shape_cast %1 : vector<1x864x8xbf16> to vector<864x8xbf16>
    %cst = arith.constant dense<0.000000e+00> : vector<128x8xf32>
    %3 = tpu.matmul %0, %2, %cst {dimension_numbers = #tpu.dot_dimension_numbers<[1], [0], [0], [1], [0, 0, 1, 1], [], []>} : vector<128x864xbf16>, vector<864x8xbf16>, vector<128x8xf32> -> vector<128x8xf32>
    %c0_4 = arith.constant 0 : index
    %c0_5 = arith.constant 0 : index
    %c0_6 = arith.constant 0 : index
    %4 = vector.load %arg4[%c0_4, %c0_5, %c0_6] : memref<1x128x8xf32, #tpu.memory_space<vmem>>, vector<1x128x8xf32>
    %5 = vector.shape_cast %4 : vector<1x128x8xf32> to vector<128x8xf32>
    %6 = vector.shape_cast %3 : vector<128x8xf32> to vector<1x128x8xf32>
    tpu.vector_store %arg4[%c0_4, %c0_5, %c0_6], %6 {strides = array<i32>} : memref<1x128x8xf32, #tpu.memory_space<vmem>>, vector<1x128x8xf32>,
    return
  }
  func.func @transform_0(%arg0: i32, %arg1: i32) -> (i32, i32, i32) {
    %c0_i32 = arith.constant 0 : i32
    %c0_i32_0 = arith.constant 0 : i32
    return %arg0, %c0_i32, %arg1 : i32, i32, i32
  }
  func.func @transform_1(%arg0: i32, %arg1: i32) -> (i32, i32) {
    %c0_i32 = arith.constant 0 : i32
    %c0_i32_0 = arith.constant 0 : i32
    %c0_i32_1 = arith.constant 0 : i32
    return %c0_i32, %c0_i32_0 : i32, i32
  }
  func.func @transform_2(%arg0: i32, %arg1: i32) -> (i32, i32, i32) {
    %c0_i32 = arith.constant 0 : i32
    %c0_i32_0 = arith.constant 0 : i32
    return %arg0, %c0_i32, %arg1 : i32, i32, i32
  }
}

</mosaic_0001>

<llo_original>
// kernel: _lambda_.1
$region0: #{_lambda_.1}
  #allocation0 [shape = 'u32[]', space=smem, size = 0x4, offset = 0x4, fixed_abs, tag = 'smem constant byte address 0x4 - core index']
  #allocation1 [shape = 'u32[144,128]{1,0:T(1,128)}', space=vmem, size = 0x12000, scoped, tag = 'internal scratch']
  %s0 = inlined_call_operand.vmem [shape: bf16[2,864,8], index: 0, kind: input, shape index: {}]
  %s1 = inlined_call_operand.vmem [shape: bf16[128,864], index: 1, kind: input, shape index: {}]
  %s2 = inlined_call_operand.vmem [shape: f32[2,128,8], index: 2, kind: output, shape index: {}]
  %s3 = sld [smem:[#allocation0]]
  $region41: #{_lambda_.1} parent=0
    _
  %s5 = ssub.s32 1, %s3
  %s6 = scalar_select 0, %s5, %s3
  loop: start=0, step=1, limit=4
  $region2: #{_lambda_.1} parent=0 // loop_pre_header
    _
  $region3: #{_lambda_.1} parent=0 // loop_header
    %s8 = sphi 0, %s12
    %p9 = scmp.ge.s32.totalorder %s8, 4
    %s15 = sphi 0, %s27
    %s16 = sphi 0, %s23
    %s17 = sphi 0, %s15
    %s18 = sphi 0, %s16
    %s19 = sphi 0, %s17
    %s20 = sphi 0, %s18
    %s32 = sphi 0, %s34
    %s35 = sphi 0, %s32
    %s36 = sphi 0, %s35
    %s52 = sphi 0, %s36
    %s56 = sphi 0, %s56
    %s58 = sphi 0, %s56
    %s59 = sphi 0, %s58
    %s73 = sphi 0, %s59
    %s81 = sphi 0, %s83
    %s84 = sphi 0, %s81
    %s85 = sphi 0, %s84
    %s101 = sphi 0, %s85
  $region4: #{_lambda_.1} parent=0 // loop_header_branch
    %11 = sbr.rel (%p9) target = $region8
  $region5: #{_lambda_.1} parent=0 // loop_body
    %s13 = ssub.s32 %s8, 1
    %s14 = ssub.s32 %s8, 2
    %s21 = sadd.s32 1, %s16
    %p22 = scmp.ge.s32.totalorder %s21, 1
    %s23 = scalar_select %p22, 0, %s21
    %s24 = sadd.s32 1, %s15
    %s25 = scalar_select %p22, %s24, %s15
    %p26 = scmp.ge.s32.totalorder %s25, 2
    %s27 = scalar_select %p26, 0, %s25
    %s28 = ssub.s32 %s15, %s27
    %s29 = ssub.s32 %s16, %s23
    %s30 = sor.u32 %s28, %s29
    %p31 = scmp.eq.s32.totalorder %s30, 0
    %s33 = sadd.s32 %s32, 1
    %s34 = scalar_select %p31, %s32, %s33
    %p37 = pneg %p31
    %p38 = scmp.eq.s32.totalorder %s8, 1
    %p39 = por %p37, %p38
    %p40 = scmp.ne.s32.totalorder %s32, %s35
    %p41 = scmp.eq.s32.totalorder %s8, 0
    %p42 = por %p40, %p41
    %p43 = scmp.ne.s32.totalorder %s32, %s35
    %p44 = scmp.eq.s32.totalorder %s13, 1
    %p45 = por %p43, %p44
    %p46 = scmp.ne.s32.totalorder %s35, %s36
    %p47 = scmp.eq.s32.totalorder %s13, 0
    %p48 = por %p46, %p47
    %p49 = scmp.ne.s32.totalorder %s35, %s36
    %p50 = scmp.eq.s32.totalorder %s14, 1
    %p51 = por %p49, %p50
    %p53 = scmp.ne.s32.totalorder %s36, %s52
    %p54 = scmp.eq.s32.totalorder %s14, 0
    %p55 = por %p53, %p54
    %s57 = sadd.s32 %s56, 1
    %p60 = scmp.eq.s32.totalorder %s8, 1
    %p61 = scmp.ne.s32.totalorder %s56, %s58
    %p62 = scmp.eq.s32.totalorder %s8, 0
    %p63 = por %p61, %p62
    %p64 = scmp.ne.s32.totalorder %s56, %s58
    %p65 = scmp.eq.s32.totalorder %s13, 1
    %p66 = por %p64, %p65
    %p67 = scmp.ne.s32.totalorder %s58, %s59
    %p68 = scmp.eq.s32.totalorder %s13, 0
    %p69 = por %p67, %p68
    %p70 = scmp.ne.s32.totalorder %s58, %s59
    %p71 = scmp.eq.s32.totalorder %s14, 1
    %p72 = por %p70, %p71
    %p74 = scmp.ne.s32.totalorder %s59, %s73
    %p75 = scmp.eq.s32.totalorder %s14, 0
    %p76 = por %p74, %p75
    %s77 = ssub.s32 %s15, %s27
    %s78 = ssub.s32 %s16, %s23
    %s79 = sor.u32 %s77, %s78
    %p80 = scmp.eq.s32.totalorder %s79, 0
    %s82 = sadd.s32 %s81, 1
    %s83 = scalar_select %p80, %s81, %s82
    %p86 = pneg %p80
    %p87 = scmp.eq.s32.totalorder %s8, 1
    %p88 = por %p86, %p87
    %p89 = scmp.ne.s32.totalorder %s81, %s84
    %p90 = scmp.eq.s32.totalorder %s8, 0
    %p91 = por %p89, %p90
    %p92 = scmp.ne.s32.totalorder %s81, %s84
    %p93 = scmp.eq.s32.totalorder %s13, 1
    %p94 = por %p92, %p93
    %p95 = scmp.ne.s32.totalorder %s84, %s85
    %p96 = scmp.eq.s32.totalorder %s13, 0
    %p97 = por %p95, %p96
    %p98 = scmp.ne.s32.totalorder %s84, %s85
    %p99 = scmp.eq.s32.totalorder %s14, 1
    %p100 = por %p98, %p99
    %p102 = scmp.ne.s32.totalorder %s85, %s101
    %p103 = scmp.eq.s32.totalorder %s14, 0
    %p104 = por %p102, %p103
    %p105 = scmp.le.s32.totalorder 1, %s8
    %p106 = scmp.lt.s32.totalorder %s8, 3
    %p107 = pnand %p105, %p106
    %p108 = pneg %p107
    // Predicated region
    $region9: #{_lambda_.1} parent=5 // pred_check
      _
    $region10: #{_lambda_.1} parent=5 // pred_check_branch
      %110 = sbr.rel (%p107) target = $region12
    $region11: #{_lambda_.1} parent=5 // pred_region
      %s111 = ssub.s32 %s8, 1
      // Predicated region
      $region13: #{_lambda_.1} parent=11 // pred_check
        %p112 = pneg %p69
      $region14: #{_lambda_.1} parent=11 // pred_check_branch
        %114 = sbr.rel (%p112) target = $region16
      $region15: #{_lambda_.1} parent=11 // pred_region
        _
      $region16: #{_lambda_.1} parent=11 // pred_fallthru
        _
    $region12: #{_lambda_.1} parent=5 // pred_fallthru
      _
    %p115 = scmp.lt.s32.totalorder %s8, 2
    // Predicated region
    $region17: #{_lambda_.1} parent=5 // pred_check
      %p116 = pneg %p115
    $region18: #{_lambda_.1} parent=5 // pred_check_branch
      %118 = sbr.rel (%p116) target = $region20
    $region19: #{_lambda_.1} parent=5 // pred_region
      // Predicated region
      $region21: #{_lambda_.1} parent=19 // pred_check
        %p119 = pneg %p42
      $region22: #{_lambda_.1} parent=19 // pred_check_branch
        %121 = sbr.rel (%p119) target = $region24
      $region23: #{_lambda_.1} parent=19 // pred_region
        %p122 = scmp.lt.s32.totalorder %s15, 1
        %s123 = scalar_select %p122, %s15, 1
        %p124 = scmp.lt.s32.totalorder %s16, 0
        %s125 = scalar_select %p124, %s16, 0
        %s126 = smul.addr %s123, 108
        %s127 = sadd.s32 %s125, %s126
        %s128 = smul.addr %s127, 4
        %s129 = scalar_lea.vmem %s0, %s128
      $region24: #{_lambda_.1} parent=19 // pred_fallthru
        _
    $region20: #{_lambda_.1} parent=5 // pred_fallthru
      _
    %p130 = scmp.le.s32.totalorder 1, %s8
    %p131 = scmp.lt.s32.totalorder %s8, 3
    %p132 = pnand %p130, %p131
    %p133 = pneg %p132
    // Predicated region
    $region25: #{_lambda_.1} parent=5 // pred_check
      _
    $region26: #{_lambda_.1} parent=5 // pred_check_branch
      %135 = sbr.rel (%p132) target = $region28
    $region27: #{_lambda_.1} parent=5 // pred_region
      %s136 = ssub.s32 %s8, 1
      %p137 = scmp.lt.s32.totalorder %s17, 1
      %s138 = scalar_select %p137, %s17, 1
      %p139 = scmp.lt.s32.totalorder %s18, 0
      %s140 = scalar_select %p139, %s18, 0
      %s141 = smul.addr %s138, 108
      %s142 = sadd.s32 %s140, %s141
      %s143 = smul.addr %s142, 4
      %s144 = scalar_lea.vmem %s0, %s143
      %p145 = pneg %p48
      %p146 = pneg %p45
      %p147 = pneg %p69
      %p148 = pneg %p66
      %p149 = pneg %p97
      %p150 = pneg %p94
      %p151 = scmp.lt.s32.totalorder %s17, 1
      %s152 = scalar_select %p151, %s17, 1
      %p153 = scmp.lt.s32.totalorder %s18, 0
      %s154 = scalar_select %p153, %s18, 0
      %s155 = smul.addr %s152, 16
      %s156 = sadd.s32 %s154, %s155
      %s157 = smul.addr %s156, 8
      %s158 = scalar_lea.vmem %s2, %s157
      %p159 = scmp.lt.s32.totalorder %s17, 1
      %s160 = scalar_select %p159, %s17, 1
      %p161 = scmp.lt.s32.totalorder %s18, 0
      %s162 = scalar_select %p161, %s18, 0
      %s163 = smul.addr %s160, 108
      %s164 = sadd.s32 %s162, %s163
      %s165 = smul.addr %s164, 4
      %s166 = scalar_lea.vmem %s0, %s165
      %p167 = scmp.lt.s32.totalorder %s17, 1
      %s168 = scalar_select %p167, %s17, 1
      %p169 = scmp.lt.s32.totalorder %s18, 0
      %s170 = scalar_select %p169, %s18, 0
      %s171 = smul.addr %s168, 16
      %s172 = sadd.s32 %s170, %s171
      %s173 = smul.addr %s172, 8
      %s174 = scalar_lea.vmem %s2, %s173
      %v176 = vld [vmem:[%s1] sm:$0xff]
      %v177 = vld [vmem:[%s1 + $0x8] sm:$0xff]
      %v178 = vld [vmem:[%s1 + $0x10] sm:$0xff]
      %v179 = vld [vmem:[%s1 + $0x18] sm:$0xf]
      %v180 = vld [vmem:[%s1 + $0x1c] sm:$0xff]
      %v181 = vld [vmem:[%s1 + $0x24] sm:$0xff]
      %v182 = vld [vmem:[%s1 + $0x2c] sm:$0xff]
      %v183 = vld [vmem:[%s1 + $0x34] sm:$0xf]
      %v184 = vld [vmem:[%s1 + $0x38] sm:$0xff]
      %v185 = vld [vmem:[%s1 + $0x40] sm:$0xff]
      %v186 = vld [vmem:[%s1 + $0x48] sm:$0xff]
      %v187 = vld [vmem:[%s1 + $0x50] sm:$0xf]
      %v188 = vld [vmem:[%s1 + $0x54] sm:$0xff]
      %v189 = vld [vmem:[%s1 + $0x5c] sm:$0xff]
      %v190 = vld [vmem:[%s1 + $0x64] sm:$0xff]
      %v191 = vld [vmem:[%s1 + $0x6c] sm:$0xf]
      %v192 = vld [vmem:[%s1 + $0x70] sm:$0xff]
      %v193 = vld [vmem:[%s1 + $0x78] sm:$0xff]
      %v194 = vld [vmem:[%s1 + $0x80] sm:$0xff]
      %v195 = vld [vmem:[%s1 + $0x88] sm:$0xf]
      %v196 = vld [vmem:[%s1 + $0x8c] sm:$0xff]
      %v197 = vld [vmem:[%s1 + $0x94] sm:$0xff]
      %v198 = vld [vmem:[%s1 + $0x9c] sm:$0xff]
      %v199 = vld [vmem:[%s1 + $0xa4] sm:$0xf]
      %v200 = vld [vmem:[%s1 + $0xa8] sm:$0xff]
      %v201 = vld [vmem:[%s1 + $0xb0] sm:$0xff]
      %v202 = vld [vmem:[%s1 + $0xb8] sm:$0xff]
      %v203 = vld [vmem:[%s1 + $0xc0] sm:$0xf]
      %v204 = vld [vmem:[%s1 + $0xc4] sm:$0xff]
      %v205 = vld [vmem:[%s1 + $0xcc] sm:$0xff]
      %v206 = vld [vmem:[%s1 + $0xd4] sm:$0xff]
      %v207 = vld [vmem:[%s1 + $0xdc] sm:$0xf]
      %v208 = vld [vmem:[%s1 + $0xe0] sm:$0xff]
      %v209 = vld [vmem:[%s1 + $0xe8] sm:$0xff]
      %v210 = vld [vmem:[%s1 + $0xf0] sm:$0xff]
      %v211 = vld [vmem:[%s1 + $0xf8] sm:$0xf]
      %v212 = vld [vmem:[%s1 + $0xfc] sm:$0xff]
      %v213 = vld [vmem:[%s1 + $0x104] sm:$0xff]
      %v214 = vld [vmem:[%s1 + $0x10c] sm:$0xff]
      %v215 = vld [vmem:[%s1 + $0x114] sm:$0xf]
      %v216 = vld [vmem:[%s1 + $0x118] sm:$0xff]
      %v217 = vld [vmem:[%s1 + $0x120] sm:$0xff]
      %v218 = vld [vmem:[%s1 + $0x128] sm:$0xff]
      %v219 = vld [vmem:[%s1 + $0x130] sm:$0xf]
      %v220 = vld [vmem:[%s1 + $0x134] sm:$0xff]
      %v221 = vld [vmem:[%s1 + $0x13c] sm:$0xff]
      %v222 = vld [vmem:[%s1 + $0x144] sm:$0xff]
      %v223 = vld [vmem:[%s1 + $0x14c] sm:$0xf]
      %v224 = vld [vmem:[%s1 + $0x150] sm:$0xff]
      %v225 = vld [vmem:[%s1 + $0x158] sm:$0xff]
      %v226 = vld [vmem:[%s1 + $0x160] sm:$0xff]
      %v227 = vld [vmem:[%s1 + $0x168] sm:$0xf]
      %v228 = vld [vmem:[%s1 + $0x16c] sm:$0xff]
      %v229 = vld [vmem:[%s1 + $0x174] sm:$0xff]
      %v230 = vld [vmem:[%s1 + $0x17c] sm:$0xff]
      %v231 = vld [vmem:[%s1 + $0x184] sm:$0xf]
      %v232 = vld [vmem:[%s1 + $0x188] sm:$0xff]
      %v233 = vld [vmem:[%s1 + $0x190] sm:$0xff]
      %v234 = vld [vmem:[%s1 + $0x198] sm:$0xff]
      %v235 = vld [vmem:[%s1 + $0x1a0] sm:$0xf]
      %v236 = vld [vmem:[%s1 + $0x1a4] sm:$0xff]
      %v237 = vld [vmem:[%s1 + $0x1ac] sm:$0xff]
      %v238 = vld [vmem:[%s1 + $0x1b4] sm:$0xff]
      %v239 = vld [vmem:[%s1 + $0x1bc] sm:$0xf]
      %v240 = vld [vmem:[%s166] sm:$0xf]
      %v241 = vld [vmem:[%s166 + $0x4] sm:$0xf]
      %v242 = vld [vmem:[%s166 + $0x8] sm:$0xf]
      %v243 = vld [vmem:[%s166 + $0xc] sm:$0xf]
      %v244 = vld [vmem:[%s166 + $0x10] sm:$0xf]
      %v245 = vld [vmem:[%s166 + $0x14] sm:$0xf]
      %v246 = vld [vmem:[%s166 + $0x18] sm:$0xf]
      %v247 = vld [vmem:[%s166 + $0x1c] sm:$0xf]
      %v248 = vld [vmem:[%s166 + $0x20] sm:$0xf]
      %v249 = vld [vmem:[%s166 + $0x24] sm:$0xf]
      %v250 = vld [vmem:[%s166 + $0x28] sm:$0xf]
      %v251 = vld [vmem:[%s166 + $0x2c] sm:$0xf]
      %v252 = vld [vmem:[%s166 + $0x30] sm:$0xf]
      %v253 = vld [vmem:[%s166 + $0x34] sm:$0xf]
      %v254 = vld [vmem:[%s166 + $0x38] sm:$0xf]
      %v255 = vld [vmem:[%s166 + $0x3c] sm:$0xf]
      %v256 = vld [vmem:[%s166 + $0x40] sm:$0xf]
      %v257 = vld [vmem:[%s166 + $0x44] sm:$0xf]
      %v258 = vld [vmem:[%s166 + $0x48] sm:$0xf]
      %v259 = vld [vmem:[%s166 + $0x4c] sm:$0xf]
      %v260 = vld [vmem:[%s166 + $0x50] sm:$0xf]
      %v261 = vld [vmem:[%s166 + $0x54] sm:$0xf]
      %v262 = vld [vmem:[%s166 + $0x58] sm:$0xf]
      %v263 = vld [vmem:[%s166 + $0x5c] sm:$0xf]
      %v264 = vld [vmem:[%s166 + $0x60] sm:$0xf]
      %v265 = vld [vmem:[%s166 + $0x64] sm:$0xf]
      %v266 = vld [vmem:[%s166 + $0x68] sm:$0xf]
      %v267 = vld [vmem:[%s166 + $0x6c] sm:$0xf]
      %v268 = vld [vmem:[%s166 + $0x70] sm:$0xf]
      %v269 = vld [vmem:[%s166 + $0x74] sm:$0xf]
      %v270 = vld [vmem:[%s166 + $0x78] sm:$0xf]
      %v271 = vld [vmem:[%s166 + $0x7c] sm:$0xf]
      %v272 = vld [vmem:[%s166 + $0x80] sm:$0xf]
      %v273 = vld [vmem:[%s166 + $0x84] sm:$0xf]
      %v274 = vld [vmem:[%s166 + $0x88] sm:$0xf]
      %v275 = vld [vmem:[%s166 + $0x8c] sm:$0xf]
      %v276 = vld [vmem:[%s166 + $0x90] sm:$0xf]
      %v277 = vld [vmem:[%s166 + $0x94] sm:$0xf]
      %v278 = vld [vmem:[%s166 + $0x98] sm:$0xf]
      %v279 = vld [vmem:[%s166 + $0x9c] sm:$0xf]
      %v280 = vld [vmem:[%s166 + $0xa0] sm:$0xf]
      %v281 = vld [vmem:[%s166 + $0xa4] sm:$0xf]
      %v282 = vld [vmem:[%s166 + $0xa8] sm:$0xf]
      %v283 = vld [vmem:[%s166 + $0xac] sm:$0xf]
      %v284 = vld [vmem:[%s166 + $0xb0] sm:$0xf]
      %v285 = vld [vmem:[%s166 + $0xb4] sm:$0xf]
      %v286 = vld [vmem:[%s166 + $0xb8] sm:$0xf]
      %v287 = vld [vmem:[%s166 + $0xbc] sm:$0xf]
      %v288 = vld [vmem:[%s166 + $0xc0] sm:$0xf]
      %v289 = vld [vmem:[%s166 + $0xc4] sm:$0xf]
      %v290 = vld [vmem:[%s166 + $0xc8] sm:$0xf]
      %v291 = vld [vmem:[%s166 + $0xcc] sm:$0xf]
      %v292 = vld [vmem:[%s166 + $0xd0] sm:$0xf]
      %v293 = vld [vmem:[%s166 + $0xd4] sm:$0xf]
      %v294 = vld [vmem:[%s166 + $0xd8] sm:$0xf]
      %v295 = vld [vmem:[%s166 + $0xdc] sm:$0xf]
      %v296 = vld [vmem:[%s166 + $0xe0] sm:$0xf]
      %v297 = vld [vmem:[%s166 + $0xe4] sm:$0xf]
      %v298 = vld [vmem:[%s166 + $0xe8] sm:$0xf]
      %v299 = vld [vmem:[%s166 + $0xec] sm:$0xf]
      %v300 = vld [vmem:[%s166 + $0xf0] sm:$0xf]
      %v301 = vld [vmem:[%s166 + $0xf4] sm:$0xf]
      %v302 = vld [vmem:[%s166 + $0xf8] sm:$0xf]
      %v303 = vld [vmem:[%s166 + $0xfc] sm:$0xf]
      %v304 = vld [vmem:[%s166 + $0x100] sm:$0xf]
      %v305 = vld [vmem:[%s166 + $0x104] sm:$0xf]
      %v306 = vld [vmem:[%s166 + $0x108] sm:$0xf]
      %v307 = vld [vmem:[%s166 + $0x10c] sm:$0xf]
      %v308 = vld [vmem:[%s166 + $0x110] sm:$0xf]
      %v309 = vld [vmem:[%s166 + $0x114] sm:$0xf]
      %v310 = vld [vmem:[%s166 + $0x118] sm:$0xf]
      %v311 = vld [vmem:[%s166 + $0x11c] sm:$0xf]
      %v312 = vld [vmem:[%s166 + $0x120] sm:$0xf]
      %v313 = vld [vmem:[%s166 + $0x124] sm:$0xf]
      %v314 = vld [vmem:[%s166 + $0x128] sm:$0xf]
      %v315 = vld [vmem:[%s166 + $0x12c] sm:$0xf]
      %v316 = vld [vmem:[%s166 + $0x130] sm:$0xf]
      %v317 = vld [vmem:[%s166 + $0x134] sm:$0xf]
      %v318 = vld [vmem:[%s166 + $0x138] sm:$0xf]
      %v319 = vld [vmem:[%s166 + $0x13c] sm:$0xf]
      %v320 = vld [vmem:[%s166 + $0x140] sm:$0xf]
      %v321 = vld [vmem:[%s166 + $0x144] sm:$0xf]
      %v322 = vld [vmem:[%s166 + $0x148] sm:$0xf]
      %v323 = vld [vmem:[%s166 + $0x14c] sm:$0xf]
      %v324 = vld [vmem:[%s166 + $0x150] sm:$0xf]
      %v325 = vld [vmem:[%s166 + $0x154] sm:$0xf]
      %v326 = vld [vmem:[%s166 + $0x158] sm:$0xf]
      %v327 = vld [vmem:[%s166 + $0x15c] sm:$0xf]
      %v328 = vld [vmem:[%s166 + $0x160] sm:$0xf]
      %v329 = vld [vmem:[%s166 + $0x164] sm:$0xf]
      %v330 = vld [vmem:[%s166 + $0x168] sm:$0xf]
      %v331 = vld [vmem:[%s166 + $0x16c] sm:$0xf]
      %v332 = vld [vmem:[%s166 + $0x170] sm:$0xf]
      %v333 = vld [vmem:[%s166 + $0x174] sm:$0xf]
      %v334 = vld [vmem:[%s166 + $0x178] sm:$0xf]
      %v335 = vld [vmem:[%s166 + $0x17c] sm:$0xf]
      %v336 = vld [vmem:[%s166 + $0x180] sm:$0xf]
      %v337 = vld [vmem:[%s166 + $0x184] sm:$0xf]
      %v338 = vld [vmem:[%s166 + $0x188] sm:$0xf]
      %v339 = vld [vmem:[%s166 + $0x18c] sm:$0xf]
      %v340 = vld [vmem:[%s166 + $0x190] sm:$0xf]
      %v341 = vld [vmem:[%s166 + $0x194] sm:$0xf]
      %v342 = vld [vmem:[%s166 + $0x198] sm:$0xf]
      %v343 = vld [vmem:[%s166 + $0x19c] sm:$0xf]
      %v344 = vld [vmem:[%s166 + $0x1a0] sm:$0xf]
      %v345 = vld [vmem:[%s166 + $0x1a4] sm:$0xf]
      %v346 = vld [vmem:[%s166 + $0x1a8] sm:$0xf]
      %v347 = vld [vmem:[%s166 + $0x1ac] sm:$0xf]
      %v412 = vunpack.c.l.b16 %v176
      %v413 = vunpack.c.h.b16 %v176
      %v414 = vunpack.c.l.b16 %v177
      %v415 = vunpack.c.h.b16 %v177
      %v416 = vunpack.c.l.b16 %v178
      %v417 = vunpack.c.h.b16 %v178
      %v418 = vunpack.c.l.b16 %v179
      %v419 = vunpack.c.l.b16 %v180
      %v420 = vunpack.c.h.b16 %v180
      %v421 = vunpack.c.l.b16 %v181
      %v422 = vunpack.c.h.b16 %v181
      %v423 = vunpack.c.l.b16 %v182
      %v424 = vunpack.c.h.b16 %v182
      %v425 = vunpack.c.l.b16 %v183
      %v426 = vunpack.c.l.b16 %v184
      %v427 = vunpack.c.h.b16 %v184
      %v428 = vunpack.c.l.b16 %v185
      %v429 = vunpack.c.h.b16 %v185
      %v430 = vunpack.c.l.b16 %v186
      %v431 = vunpack.c.h.b16 %v186
      %v432 = vunpack.c.l.b16 %v187
      %v433 = vunpack.c.l.b16 %v188
      %v434 = vunpack.c.h.b16 %v188
      %v435 = vunpack.c.l.b16 %v189
      %v436 = vunpack.c.h.b16 %v189
      %v437 = vunpack.c.l.b16 %v190
      %v438 = vunpack.c.h.b16 %v190
      %v439 = vunpack.c.l.b16 %v191
      %v440 = vunpack.c.l.b16 %v192
      %v441 = vunpack.c.h.b16 %v192
      %v442 = vunpack.c.l.b16 %v193
      %v443 = vunpack.c.h.b16 %v193
      %v444 = vunpack.c.l.b16 %v194
      %v445 = vunpack.c.h.b16 %v194
      %v446 = vunpack.c.l.b16 %v195
      %v447 = vunpack.c.l.b16 %v196
      %v448 = vunpack.c.h.b16 %v196
      %v449 = vunpack.c.l.b16 %v197
      %v450 = vunpack.c.h.b16 %v197
      %v451 = vunpack.c.l.b16 %v198
      %v452 = vunpack.c.h.b16 %v198
      %v453 = vunpack.c.l.b16 %v199
      %v454 = vunpack.c.l.b16 %v200
      %v455 = vunpack.c.h.b16 %v200
      %v456 = vunpack.c.l.b16 %v201
      %v457 = vunpack.c.h.b16 %v201
      %v458 = vunpack.c.l.b16 %v202
      %v459 = vunpack.c.h.b16 %v202
      %v460 = vunpack.c.l.b16 %v203
      %v461 = vunpack.c.l.b16 %v204
      %v462 = vunpack.c.h.b16 %v204
      %v463 = vunpack.c.l.b16 %v205
      %v464 = vunpack.c.h.b16 %v205
      %v465 = vunpack.c.l.b16 %v206
      %v466 = vunpack.c.h.b16 %v206
      %v467 = vunpack.c.l.b16 %v207
      %v468 = vunpack.c.l.b16 %v208
      %v469 = vunpack.c.h.b16 %v208
      %v470 = vunpack.c.l.b16 %v209
      %v471 = vunpack.c.h.b16 %v209
      %v472 = vunpack.c.l.b16 %v210
      %v473 = vunpack.c.h.b16 %v210
      %v474 = vunpack.c.l.b16 %v211
      %v475 = vunpack.c.l.b16 %v212
      %v476 = vunpack.c.h.b16 %v212
      %v477 = vunpack.c.l.b16 %v213
      %v478 = vunpack.c.h.b16 %v213
      %v479 = vunpack.c.l.b16 %v214
      %v480 = vunpack.c.h.b16 %v214
      %v481 = vunpack.c.l.b16 %v215
      %v482 = vunpack.c.l.b16 %v216
      %v483 = vunpack.c.h.b16 %v216
      %v484 = vunpack.c.l.b16 %v217
      %v485 = vunpack.c.h.b16 %v217
      %v486 = vunpack.c.l.b16 %v218
      %v487 = vunpack.c.h.b16 %v218
      %v488 = vunpack.c.l.b16 %v219
      %v489 = vunpack.c.l.b16 %v220
      %v490 = vunpack.c.h.b16 %v220
      %v491 = vunpack.c.l.b16 %v221
      %v492 = vunpack.c.h.b16 %v221
      %v493 = vunpack.c.l.b16 %v222
      %v494 = vunpack.c.h.b16 %v222
      %v495 = vunpack.c.l.b16 %v223
      %v496 = vunpack.c.l.b16 %v224
      %v497 = vunpack.c.h.b16 %v224
      %v498 = vunpack.c.l.b16 %v225
      %v499 = vunpack.c.h.b16 %v225
      %v500 = vunpack.c.l.b16 %v226
      %v501 = vunpack.c.h.b16 %v226
      %v502 = vunpack.c.l.b16 %v227
      %v503 = vunpack.c.l.b16 %v228
      %v504 = vunpack.c.h.b16 %v228
      %v505 = vunpack.c.l.b16 %v229
      %v506 = vunpack.c.h.b16 %v229
      %v507 = vunpack.c.l.b16 %v230
      %v508 = vunpack.c.h.b16 %v230
      %v509 = vunpack.c.l.b16 %v231
      %v510 = vunpack.c.l.b16 %v232
      %v511 = vunpack.c.h.b16 %v232
      %v512 = vunpack.c.l.b16 %v233
      %v513 = vunpack.c.h.b16 %v233
      %v514 = vunpack.c.l.b16 %v234
      %v515 = vunpack.c.h.b16 %v234
      %v516 = vunpack.c.l.b16 %v235
      %v517 = vunpack.c.l.b16 %v236
      %v518 = vunpack.c.h.b16 %v236
      %v519 = vunpack.c.l.b16 %v237
      %v520 = vunpack.c.h.b16 %v237
      %v521 = vunpack.c.l.b16 %v238
      %v522 = vunpack.c.h.b16 %v238
      %v523 = vunpack.c.l.b16 %v239
      %v524 = vpack.c.b16 %v419, %v412
      %v525 = vpack.c.b16 %v420, %v413
      %v526 = vpack.c.b16 %v421, %v414
      %v527 = vpack.c.b16 %v422, %v415
      %v528 = vpack.c.b16 %v423, %v416
      %v529 = vpack.c.b16 %v424, %v417
      %v530 = vpack.c.b16 %v425, %v418
      %v531 = vpack.c.b16 %v433, %v426
      %v532 = vpack.c.b16 %v434, %v427
      %v533 = vpack.c.b16 %v435, %v428
      %v534 = vpack.c.b16 %v436, %v429
      %v535 = vpack.c.b16 %v437, %v430
      %v536 = vpack.c.b16 %v438, %v431
      %v537 = vpack.c.b16 %v439, %v432
      %v538 = vpack.c.b16 %v447, %v440
      %v539 = vpack.c.b16 %v448, %v441
      %v540 = vpack.c.b16 %v449, %v442
      %v541 = vpack.c.b16 %v450, %v443
      %v542 = vpack.c.b16 %v451, %v444
      %v543 = vpack.c.b16 %v452, %v445
      %v544 = vpack.c.b16 %v453, %v446
      %v545 = vpack.c.b16 %v461, %v454
      %v546 = vpack.c.b16 %v462, %v455
      %v547 = vpack.c.b16 %v463, %v456
      %v548 = vpack.c.b16 %v464, %v457
      %v549 = vpack.c.b16 %v465, %v458
      %v550 = vpack.c.b16 %v466, %v459
      %v551 = vpack.c.b16 %v467, %v460
      %v552 = vpack.c.b16 %v475, %v468
      %v553 = vpack.c.b16 %v476, %v469
      %v554 = vpack.c.b16 %v477, %v470
      %v555 = vpack.c.b16 %v478, %v471
      %v556 = vpack.c.b16 %v479, %v472
      %v557 = vpack.c.b16 %v480, %v473
      %v558 = vpack.c.b16 %v481, %v474
      %v559 = vpack.c.b16 %v489, %v482
      %v560 = vpack.c.b16 %v490, %v483
      %v561 = vpack.c.b16 %v491, %v484
      %v562 = vpack.c.b16 %v492, %v485
      %v563 = vpack.c.b16 %v493, %v486
      %v564 = vpack.c.b16 %v494, %v487
      %v565 = vpack.c.b16 %v495, %v488
      %v566 = vpack.c.b16 %v503, %v496
      %v567 = vpack.c.b16 %v504, %v497
      %v568 = vpack.c.b16 %v505, %v498
      %v569 = vpack.c.b16 %v506, %v499
      %v570 = vpack.c.b16 %v507, %v500
      %v571 = vpack.c.b16 %v508, %v501
      %v572 = vpack.c.b16 %v509, %v502
      %v573 = vpack.c.b16 %v517, %v510
      %v574 = vpack.c.b16 %v518, %v511
      %v575 = vpack.c.b16 %v519, %v512
      %v576 = vpack.c.b16 %v520, %v513
      %v577 = vpack.c.b16 %v521, %v514
      %v578 = vpack.c.b16 %v522, %v515
      %v579 = vpack.c.b16 %v523, %v516
      %v736 = vunpack.c.l.b16 %v240
      %v737 = vunpack.c.l.b16 %v241
      %v738 = vunpack.c.l.b16 %v242
      %v739 = vunpack.c.l.b16 %v243
      %v740 = vunpack.c.l.b16 %v244
      %v741 = vunpack.c.l.b16 %v245
      %v742 = vunpack.c.l.b16 %v246
      %v743 = vunpack.c.l.b16 %v247
      %v744 = vunpack.c.l.b16 %v248
      %v745 = vunpack.c.l.b16 %v249
      %v746 = vunpack.c.l.b16 %v250
      %v747 = vunpack.c.l.b16 %v251
      %v748 = vunpack.c.l.b16 %v252
      %v749 = vunpack.c.l.b16 %v253
      %v750 = vunpack.c.l.b16 %v254
      %v751 = vunpack.c.l.b16 %v255
      %v752 = vunpack.c.l.b16 %v256
      %v753 = vunpack.c.l.b16 %v257
      %v754 = vunpack.c.l.b16 %v258
      %v755 = vunpack.c.l.b16 %v259
      %v756 = vunpack.c.l.b16 %v260
      %v757 = vunpack.c.l.b16 %v261
      %v758 = vunpack.c.l.b16 %v262
      %v759 = vunpack.c.l.b16 %v263
      %v760 = vunpack.c.l.b16 %v264
      %v761 = vunpack.c.l.b16 %v265
      %v762 = vunpack.c.l.b16 %v266
      %v763 = vunpack.c.l.b16 %v267
      %v764 = vunpack.c.l.b16 %v268
      %v765 = vunpack.c.l.b16 %v269
      %v766 = vunpack.c.l.b16 %v270
      %v767 = vunpack.c.l.b16 %v271
      %v768 = vunpack.c.l.b16 %v272
      %v769 = vunpack.c.l.b16 %v273
      %v770 = vunpack.c.l.b16 %v274
      %v771 = vunpack.c.l.b16 %v275
      %v772 = vunpack.c.l.b16 %v276
      %v773 = vunpack.c.l.b16 %v277
      %v774 = vunpack.c.l.b16 %v278
      %v775 = vunpack.c.l.b16 %v279
      %v776 = vunpack.c.l.b16 %v280
      %v777 = vunpack.c.l.b16 %v281
      %v778 = vunpack.c.l.b16 %v282
      %v779 = vunpack.c.l.b16 %v283
      %v780 = vunpack.c.l.b16 %v284
      %v781 = vunpack.c.l.b16 %v285
      %v782 = vunpack.c.l.b16 %v286
      %v783 = vunpack.c.l.b16 %v287
      %v784 = vunpack.c.l.b16 %v288
      %v785 = vunpack.c.l.b16 %v289
      %v786 = vunpack.c.l.b16 %v290
      %v787 = vunpack.c.l.b16 %v291
      %v788 = vunpack.c.l.b16 %v292
      %v789 = vunpack.c.l.b16 %v293
      %v790 = vunpack.c.l.b16 %v294
      %v791 = vunpack.c.l.b16 %v295
      %v792 = vunpack.c.l.b16 %v296
      %v793 = vunpack.c.l.b16 %v297
      %v794 = vunpack.c.l.b16 %v298
      %v795 = vunpack.c.l.b16 %v299
      %v796 = vunpack.c.l.b16 %v300
      %v797 = vunpack.c.l.b16 %v301
      %v798 = vunpack.c.l.b16 %v302
      %v799 = vunpack.c.l.b16 %v303
      %v800 = vunpack.c.l.b16 %v304
      %v801 = vunpack.c.l.b16 %v305
      %v802 = vunpack.c.l.b16 %v306
      %v803 = vunpack.c.l.b16 %v307
      %v804 = vunpack.c.l.b16 %v308
      %v805 = vunpack.c.l.b16 %v309
      %v806 = vunpack.c.l.b16 %v310
      %v807 = vunpack.c.l.b16 %v311
      %v808 = vunpack.c.l.b16 %v312
      %v809 = vunpack.c.l.b16 %v313
      %v810 = vunpack.c.l.b16 %v314
      %v811 = vunpack.c.l.b16 %v315
      %v812 = vunpack.c.l.b16 %v316
      %v813 = vunpack.c.l.b16 %v317
      %v814 = vunpack.c.l.b16 %v318
      %v815 = vunpack.c.l.b16 %v319
      %v816 = vunpack.c.l.b16 %v320
      %v817 = vunpack.c.l.b16 %v321
      %v818 = vunpack.c.l.b16 %v322
      %v819 = vunpack.c.l.b16 %v323
      %v820 = vunpack.c.l.b16 %v324
      %v821 = vunpack.c.l.b16 %v325
      %v822 = vunpack.c.l.b16 %v326
      %v823 = vunpack.c.l.b16 %v327
      %v824 = vunpack.c.l.b16 %v328
      %v825 = vunpack.c.l.b16 %v329
      %v826 = vunpack.c.l.b16 %v330
      %v827 = vunpack.c.l.b16 %v331
      %v828 = vunpack.c.l.b16 %v332
      %v829 = vunpack.c.l.b16 %v333
      %v830 = vunpack.c.l.b16 %v334
      %v831 = vunpack.c.l.b16 %v335
      %v832 = vunpack.c.l.b16 %v336
      %v833 = vunpack.c.l.b16 %v337
      %v834 = vunpack.c.l.b16 %v338
      %v835 = vunpack.c.l.b16 %v339
      %v836 = vunpack.c.l.b16 %v340
      %v837 = vunpack.c.l.b16 %v341
      %v838 = vunpack.c.l.b16 %v342
      %v839 = vunpack.c.l.b16 %v343
      %v840 = vunpack.c.l.b16 %v344
      %v841 = vunpack.c.l.b16 %v345
      %v842 = vunpack.c.l.b16 %v346
      %v843 = vunpack.c.l.b16 %v347
      %v844 = vpack.c.b16 %v737, %v736
      %v845 = vpack.c.b16 %v739, %v738
      %v846 = vpack.c.b16 %v741, %v740
      %v847 = vpack.c.b16 %v743, %v742
      %v848 = vpack.c.b16 %v745, %v744
      %v849 = vpack.c.b16 %v747, %v746
      %v850 = vpack.c.b16 %v749, %v748
      %v851 = vpack.c.b16 %v751, %v750
      %v852 = vpack.c.b16 %v753, %v752
      %v853 = vpack.c.b16 %v755, %v754
      %v854 = vpack.c.b16 %v757, %v756
      %v855 = vpack.c.b16 %v759, %v758
      %v856 = vpack.c.b16 %v761, %v760
      %v857 = vpack.c.b16 %v763, %v762
      %v858 = vpack.c.b16 %v765, %v764
      %v859 = vpack.c.b16 %v767, %v766
      %v860 = vpack.c.b16 %v769, %v768
      %v861 = vpack.c.b16 %v771, %v770
      %v862 = vpack.c.b16 %v773, %v772
      %v863 = vpack.c.b16 %v775, %v774
      %v864 = vpack.c.b16 %v777, %v776
      %v865 = vpack.c.b16 %v779, %v778
      %v866 = vpack.c.b16 %v781, %v780
      %v867 = vpack.c.b16 %v783, %v782
      %v868 = vpack.c.b16 %v785, %v784
      %v869 = vpack.c.b16 %v787, %v786
      %v870 = vpack.c.b16 %v789, %v788
      %v871 = vpack.c.b16 %v791, %v790
      %v872 = vpack.c.b16 %v793, %v792
      %v873 = vpack.c.b16 %v795, %v794
      %v874 = vpack.c.b16 %v797, %v796
      %v875 = vpack.c.b16 %v799, %v798
      %v876 = vpack.c.b16 %v801, %v800
      %v877 = vpack.c.b16 %v803, %v802
      %v878 = vpack.c.b16 %v805, %v804
      %v879 = vpack.c.b16 %v807, %v806
      %v880 = vpack.c.b16 %v809, %v808
      %v881 = vpack.c.b16 %v811, %v810
      %v882 = vpack.c.b16 %v813, %v812
      %v883 = vpack.c.b16 %v815, %v814
      %v884 = vpack.c.b16 %v817, %v816
      %v885 = vpack.c.b16 %v819, %v818
      %v886 = vpack.c.b16 %v821, %v820
      %v887 = vpack.c.b16 %v823, %v822
      %v888 = vpack.c.b16 %v825, %v824
      %v889 = vpack.c.b16 %v827, %v826
      %v890 = vpack.c.b16 %v829, %v828
      %v891 = vpack.c.b16 %v831, %v830
      %v892 = vpack.c.b16 %v833, %v832
      %v893 = vpack.c.b16 %v835, %v834
      %v894 = vpack.c.b16 %v837, %v836
      %v895 = vpack.c.b16 %v839, %v838
      %v896 = vpack.c.b16 %v841, %v840
      %v897 = vpack.c.b16 %v843, %v842
      %vm952 = vcmask 785408
      %v954 = vsel %vm952, %v530, 0
      %v957 = vsel %vm952, %v537, 0
      %v960 = vsel %vm952, %v544, 0
      %v963 = vsel %vm952, %v551, 0
      %v966 = vsel %vm952, %v558, 0
      %v969 = vsel %vm952, %v565, 0
      %v972 = vsel %vm952, %v572, 0
      %v975 = vsel %vm952, %v579, 0
      %977 = vmatprep.subr.bf16.mxu0 0
      %978 = vmatpush1.bf16.msra.mxu0 %v844
      %979 = vmatprep.subr.bf16.mxu0 0
      %980 = vmatpush1.bf16.msra.mxu0 %v845
      %981 = vmatprep.subr.bf16.mxu0 0
      %982 = vmatpush1.bf16.msra.mxu0 %v846
      %983 = vmatprep.subr.bf16.mxu0 0
      %984 = vmatpush1.bf16.msra.mxu0 %v847
      %985 = vmatprep.subr.bf16.mxu0 0
      %986 = vmatpush1.bf16.msra.mxu0 %v848
      %987 = vmatprep.subr.bf16.mxu0 0
      %988 = vmatpush1.bf16.msra.mxu0 %v849
      %989 = vmatprep.subr.bf16.mxu0 0
      %990 = vmatpush1.bf16.msra.mxu0 %v850
      %991 = vmatprep.subr.bf16.mxu0 0
      %992 = vmatpush1.bf16.msra.mxu0 %v851
      %993 = vmatprep.subr.bf16.mxu0 0
      %994 = vmatpush1.bf16.msra.mxu0 %v852
      %995 = vmatprep.subr.bf16.mxu0 0
      %996 = vmatpush1.bf16.msra.mxu0 %v853
      %997 = vmatprep.subr.bf16.mxu0 0
      %998 = vmatpush1.bf16.msra.mxu0 %v854
      %999 = vmatprep.subr.bf16.mxu0 0
      %1000 = vmatpush1.bf16.msra.mxu0 %v855
      %1001 = vmatprep.subr.bf16.mxu0 0
      %1002 = vmatpush1.bf16.msra.mxu0 %v856
      %1003 = vmatprep.subr.bf16.mxu0 0
      %1004 = vmatpush1.bf16.msra.mxu0 %v857
      %1005 = vmatprep.subr.bf16.mxu0 0
      %1006 = vmatpush1.bf16.msra.mxu0 %v858
      %1007 = vmatprep.subr.bf16.mxu0 0
      %1008 = vmatpush1.bf16.msra.mxu0 %v859
      %1009 = vmatprep.mubr.bf16.mxu0 %v525
      %1010 = vmatmul.mubr.bf16.gmra.mrb[0].mxu0 %v524
      %v1011 = vpop.f32.mrb[0].mxu0
      %v1012 = vadd.f32 0.0, %v1011
      %v1013 = vpop.f32.mrb[0].mxu0
      %v1014 = vpop.f32.mrb[0].mxu0
      %v1015 = vadd.f32 0.0, %v1014
      %v1016 = vpop.f32.mrb[0].mxu0
      %1017 = vmatprep.mubr.bf16.mxu0 %v532
      %1018 = vmatmul.mubr.bf16.gmra.mrb[0].mxu0 %v531
      %v1019 = vpop.f32.mrb[0].mxu0
      %v1020 = vadd.f32 0.0, %v1019
      %v1021 = vpop.f32.mrb[0].mxu0
      %v1022 = vpop.f32.mrb[0].mxu0
      %v1023 = vadd.f32 0.0, %v1022
      %v1024 = vpop.f32.mrb[0].mxu0
      %1025 = vmatprep.mubr.bf16.mxu0 %v539
      %1026 = vmatmul.mubr.bf16.gmra.mrb[0].mxu0 %v538
      %v1027 = vpop.f32.mrb[0].mxu0
      %v1028 = vadd.f32 0.0, %v1027
      %v1029 = vpop.f32.mrb[0].mxu0
      %v1030 = vpop.f32.mrb[0].mxu0
      %v1031 = vadd.f32 0.0, %v1030
      %v1032 = vpop.f32.mrb[0].mxu0
      %1033 = vmatprep.mubr.bf16.mxu0 %v546
      %1034 = vmatmul.mubr.bf16.gmra.mrb[0].mxu0 %v545
      %v1035 = vpop.f32.mrb[0].mxu0
      %v1036 = vadd.f32 0.0, %v1035
      %v1037 = vpop.f32.mrb[0].mxu0
      %v1038 = vpop.f32.mrb[0].mxu0
      %v1039 = vadd.f32 0.0, %v1038
      %v1040 = vpop.f32.mrb[0].mxu0
      %1041 = vmatprep.mubr.bf16.mxu0 %v553
      %1042 = vmatmul.mubr.bf16.gmra.mrb[0].mxu0 %v552
      %v1043 = vpop.f32.mrb[0].mxu0
      %v1044 = vadd.f32 0.0, %v1043
      %v1045 = vpop.f32.mrb[0].mxu0
      %v1046 = vpop.f32.mrb[0].mxu0
      %v1047 = vadd.f32 0.0, %v1046
      %v1048 = vpop.f32.mrb[0].mxu0
      %1049 = vmatprep.mubr.bf16.mxu0 %v560
      %1050 = vmatmul.mubr.bf16.gmra.mrb[0].mxu0 %v559
      %v1051 = vpop.f32.mrb[0].mxu0
      %v1052 = vadd.f32 0.0, %v1051
      %v1053 = vpop.f32.mrb[0].mxu0
      %v1054 = vpop.f32.mrb[0].mxu0
      %v1055 = vadd.f32 0.0, %v1054
      %v1056 = vpop.f32.mrb[0].mxu0
      %1057 = vmatprep.mubr.bf16.mxu0 %v567
      %1058 = vmatmul.mubr.bf16.gmra.mrb[0].mxu0 %v566
      %v1059 = vpop.f32.mrb[0].mxu0
      %v1060 = vadd.f32 0.0, %v1059
      %v1061 = vpop.f32.mrb[0].mxu0
      %v1062 = vpop.f32.mrb[0].mxu0
      %v1063 = vadd.f32 0.0, %v1062
      %v1064 = vpop.f32.mrb[0].mxu0
      %1065 = vmatprep.mubr.bf16.mxu0 %v574
      %1066 = vmatmul.mubr.bf16.gmra.mrb[0].mxu0 %v573
      %v1067 = vpop.f32.mrb[0].mxu0
      %v1068 = vadd.f32 0.0, %v1067
      %v1069 = vpop.f32.mrb[0].mxu0
      %v1070 = vpop.f32.mrb[0].mxu0
      %v1071 = vadd.f32 0.0, %v1070
      %v1072 = vpop.f32.mrb[0].mxu0
      %1073 = vdwg.mxu0
      %1074 = vmatprep.subr.bf16.mxu0 0
      %1075 = vmatpush1.bf16.msra.mxu0 %v860
      %1076 = vmatprep.subr.bf16.mxu0 0
      %1077 = vmatpush1.bf16.msra.mxu0 %v861
      %1078 = vmatprep.subr.bf16.mxu0 0
      %1079 = vmatpush1.bf16.msra.mxu0 %v862
      %1080 = vmatprep.subr.bf16.mxu0 0
      %1081 = vmatpush1.bf16.msra.mxu0 %v863
      %1082 = vmatprep.subr.bf16.mxu0 0
      %1083 = vmatpush1.bf16.msra.mxu0 %v864
      %1084 = vmatprep.subr.bf16.mxu0 0
      %1085 = vmatpush1.bf16.msra.mxu0 %v865
      %1086 = vmatprep.subr.bf16.mxu0 0
      %1087 = vmatpush1.bf16.msra.mxu0 %v866
      %1088 = vmatprep.subr.bf16.mxu0 0
      %1089 = vmatpush1.bf16.msra.mxu0 %v867
      %1090 = vmatprep.subr.bf16.mxu0 0
      %1091 = vmatpush1.bf16.msra.mxu0 %v868
      %1092 = vmatprep.subr.bf16.mxu0 0
      %1093 = vmatpush1.bf16.msra.mxu0 %v869
      %1094 = vmatprep.subr.bf16.mxu0 0
      %1095 = vmatpush1.bf16.msra.mxu0 %v870
      %1096 = vmatprep.subr.bf16.mxu0 0
      %1097 = vmatpush1.bf16.msra.mxu0 %v871
      %1098 = vmatprep.subr.bf16.mxu0 0
      %1099 = vmatpush1.bf16.msra.mxu0 %v872
      %1100 = vmatprep.subr.bf16.mxu0 0
      %1101 = vmatpush1.bf16.msra.mxu0 %v873
      %1102 = vmatprep.subr.bf16.mxu0 0
      %1103 = vmatpush1.bf16.msra.mxu0 %v874
      %1104 = vmatprep.subr.bf16.mxu0 0
      %1105 = vmatpush1.bf16.msra.mxu0 %v875
      %1106 = vmatprep.mubr.bf16.mxu0 %v527
      %1107 = vmatmul.mubr.bf16.gmra.mrb[0].mxu0 %v526
      %v1108 = vpop.f32.mrb[0].mxu0
      %v1109 = vadd.f32 %v1012, %v1108
      %v1110 = vpop.f32.mrb[0].mxu0
      %v1111 = vpop.f32.mrb[0].mxu0
      %v1112 = vadd.f32 %v1015, %v1111
      %v1113 = vpop.f32.mrb[0].mxu0
      %1114 = vmatprep.mubr.bf16.mxu0 %v534
      %1115 = vmatmul.mubr.bf16.gmra.mrb[0].mxu0 %v533
      %v1116 = vpop.f32.mrb[0].mxu0
      %v1117 = vadd.f32 %v1020, %v1116
      %v1118 = vpop.f32.mrb[0].mxu0
      %v1119 = vpop.f32.mrb[0].mxu0
      %v1120 = vadd.f32 %v1023, %v1119
      %v1121 = vpop.f32.mrb[0].mxu0
      %1122 = vmatprep.mubr.bf16.mxu0 %v541
      %1123 = vmatmul.mubr.bf16.gmra.mrb[0].mxu0 %v540
      %v1124 = vpop.f32.mrb[0].mxu0
      %v1125 = vadd.f32 %v1028, %v1124
      %v1126 = vpop.f32.mrb[0].mxu0
      %v1127 = vpop.f32.mrb[0].mxu0
      %v1128 = vadd.f32 %v1031, %v1127
      %v1129 = vpop.f32.mrb[0].mxu0
      %1130 = vmatprep.mubr.bf16.mxu0 %v548
      %1131 = vmatmul.mubr.bf16.gmra.mrb[0].mxu0 %v547
      %v1132 = vpop.f32.mrb[0].mxu0
      %v1133 = vadd.f32 %v1036, %v1132
      %v1134 = vpop.f32.mrb[0].mxu0
      %v1135 = vpop.f32.mrb[0].mxu0
      %v1136 = vadd.f32 %v1039, %v1135
      %v1137 = vpop.f32.mrb[0].mxu0
      %1138 = vmatprep.mubr.bf16.mxu0 %v555
      %1139 = vmatmul.mubr.bf16.gmra.mrb[0].mxu0 %v554
      %v1140 = vpop.f32.mrb[0].mxu0
      %v1141 = vadd.f32 %v1044, %v1140
      %v1142 = vpop.f32.mrb[0].mxu0
      %v1143 = vpop.f32.mrb[0].mxu0
      %v1144 = vadd.f32 %v1047, %v1143
      %v1145 = vpop.f32.mrb[0].mxu0
      %1146 = vmatprep.mubr.bf16.mxu0 %v562
      %1147 = vmatmul.mubr.bf16.gmra.mrb[0].mxu0 %v561
      %v1148 = vpop.f32.mrb[0].mxu0
      %v1149 = vadd.f32 %v1052, %v1148
      %v1150 = vpop.f32.mrb[0].mxu0
      %v1151 = vpop.f32.mrb[0].mxu0
      %v1152 = vadd.f32 %v1055, %v1151
      %v1153 = vpop.f32.mrb[0].mxu0
      %1154 = vmatprep.mubr.bf16.mxu0 %v569
      %1155 = vmatmul.mubr.bf16.gmra.mrb[0].mxu0 %v568
      %v1156 = vpop.f32.mrb[0].mxu0
      %v1157 = vadd.f32 %v1060, %v1156
      %v1158 = vpop.f32.mrb[0].mxu0
      %v1159 = vpop.f32.mrb[0].mxu0
      %v1160 = vadd.f32 %v1063, %v1159
      %v1161 = vpop.f32.mrb[0].mxu0
      %1162 = vmatprep.mubr.bf16.mxu0 %v576
      %1163 = vmatmul.mubr.bf16.gmra.mrb[0].mxu0 %v575
      %v1164 = vpop.f32.mrb[0].mxu0
      %v1165 = vadd.f32 %v1068, %v1164
      %v1166 = vpop.f32.mrb[0].mxu0
      %v1167 = vpop.f32.mrb[0].mxu0
      %v1168 = vadd.f32 %v1071, %v1167
      %v1169 = vpop.f32.mrb[0].mxu0
      %1170 = vdwg.mxu0
      %1171 = vmatprep.subr.bf16.mxu0 0
      %1172 = vmatpush1.bf16.msra.mxu0 %v876
      %1173 = vmatprep.subr.bf16.mxu0 0
      %1174 = vmatpush1.bf16.msra.mxu0 %v877
      %1175 = vmatprep.subr.bf16.mxu0 0
      %1176 = vmatpush1.bf16.msra.mxu0 %v878
      %1177 = vmatprep.subr.bf16.mxu0 0
      %1178 = vmatpush1.bf16.msra.mxu0 %v879
      %1179 = vmatprep.subr.bf16.mxu0 0
      %1180 = vmatpush1.bf16.msra.mxu0 %v880
      %1181 = vmatprep.subr.bf16.mxu0 0
      %1182 = vmatpush1.bf16.msra.mxu0 %v881
      %1183 = vmatprep.subr.bf16.mxu0 0
      %1184 = vmatpush1.bf16.msra.mxu0 %v882
      %1185 = vmatprep.subr.bf16.mxu0 0
      %1186 = vmatpush1.bf16.msra.mxu0 %v883
      %1187 = vmatprep.subr.bf16.mxu0 0
      %1188 = vmatpush1.bf16.msra.mxu0 %v884
      %1189 = vmatprep.subr.bf16.mxu0 0
      %1190 = vmatpush1.bf16.msra.mxu0 %v885
      %1191 = vmatprep.subr.bf16.mxu0 0
      %1192 = vmatpush1.bf16.msra.mxu0 %v886
      %1193 = vmatprep.subr.bf16.mxu0 0
      %1194 = vmatpush1.bf16.msra.mxu0 %v887
      %1195 = vmatprep.subr.bf16.mxu0 0
      %1196 = vmatpush1.bf16.msra.mxu0 %v888
      %1197 = vmatprep.subr.bf16.mxu0 0
      %1198 = vmatpush1.bf16.msra.mxu0 %v889
      %1199 = vmatprep.subr.bf16.mxu0 0
      %1200 = vmatpush1.bf16.msra.mxu0 %v890
      %1201 = vmatprep.subr.bf16.mxu0 0
      %1202 = vmatpush1.bf16.msra.mxu0 %v891
      %1203 = vmatprep.mubr.bf16.mxu0 %v529
      %1204 = vmatmul.mubr.bf16.gmra.mrb[0].mxu0 %v528
      %v1205 = vpop.f32.mrb[0].mxu0
      %v1206 = vadd.f32 %v1109, %v1205
      %v1207 = vpop.f32.mrb[0].mxu0
      %v1208 = vpop.f32.mrb[0].mxu0
      %v1209 = vadd.f32 %v1112, %v1208
      %v1210 = vpop.f32.mrb[0].mxu0
      %1211 = vmatprep.mubr.bf16.mxu0 %v536
      %1212 = vmatmul.mubr.bf16.gmra.mrb[0].mxu0 %v535
      %v1213 = vpop.f32.mrb[0].mxu0
      %v1214 = vadd.f32 %v1117, %v1213
      %v1215 = vpop.f32.mrb[0].mxu0
      %v1216 = vpop.f32.mrb[0].mxu0
      %v1217 = vadd.f32 %v1120, %v1216
      %v1218 = vpop.f32.mrb[0].mxu0
      %1219 = vmatprep.mubr.bf16.mxu0 %v543
      %1220 = vmatmul.mubr.bf16.gmra.mrb[0].mxu0 %v542
      %v1221 = vpop.f32.mrb[0].mxu0
      %v1222 = vadd.f32 %v1125, %v1221
      %v1223 = vpop.f32.mrb[0].mxu0
      %v1224 = vpop.f32.mrb[0].mxu0
      %v1225 = vadd.f32 %v1128, %v1224
      %v1226 = vpop.f32.mrb[0].mxu0
      %1227 = vmatprep.mubr.bf16.mxu0 %v550
      %1228 = vmatmul.mubr.bf16.gmra.mrb[0].mxu0 %v549
      %v1229 = vpop.f32.mrb[0].mxu0
      %v1230 = vadd.f32 %v1133, %v1229
      %v1231 = vpop.f32.mrb[0].mxu0
      %v1232 = vpop.f32.mrb[0].mxu0
      %v1233 = vadd.f32 %v1136, %v1232
      %v1234 = vpop.f32.mrb[0].mxu0
      %1235 = vmatprep.mubr.bf16.mxu0 %v557
      %1236 = vmatmul.mubr.bf16.gmra.mrb[0].mxu0 %v556
      %v1237 = vpop.f32.mrb[0].mxu0
      %v1238 = vadd.f32 %v1141, %v1237
      %v1239 = vpop.f32.mrb[0].mxu0
      %v1240 = vpop.f32.mrb[0].mxu0
      %v1241 = vadd.f32 %v1144, %v1240
      %v1242 = vpop.f32.mrb[0].mxu0
      %1243 = vmatprep.mubr.bf16.mxu0 %v564
      %1244 = vmatmul.mubr.bf16.gmra.mrb[0].mxu0 %v563
      %v1245 = vpop.f32.mrb[0].mxu0
      %v1246 = vadd.f32 %v1149, %v1245
      %v1247 = vpop.f32.mrb[0].mxu0
      %v1248 = vpop.f32.mrb[0].mxu0
      %v1249 = vadd.f32 %v1152, %v1248
      %v1250 = vpop.f32.mrb[0].mxu0
      %1251 = vmatprep.mubr.bf16.mxu0 %v571
      %1252 = vmatmul.mubr.bf16.gmra.mrb[0].mxu0 %v570
      %v1253 = vpop.f32.mrb[0].mxu0
      %v1254 = vadd.f32 %v1157, %v1253
      %v1255 = vpop.f32.mrb[0].mxu0
      %v1256 = vpop.f32.mrb[0].mxu0
      %v1257 = vadd.f32 %v1160, %v1256
      %v1258 = vpop.f32.mrb[0].mxu0
      %1259 = vmatprep.mubr.bf16.mxu0 %v578
      %1260 = vmatmul.mubr.bf16.gmra.mrb[0].mxu0 %v577
      %v1261 = vpop.f32.mrb[0].mxu0
      %v1262 = vadd.f32 %v1165, %v1261
      %v1263 = vpop.f32.mrb[0].mxu0
      %v1264 = vpop.f32.mrb[0].mxu0
      %v1265 = vadd.f32 %v1168, %v1264
      %v1266 = vpop.f32.mrb[0].mxu0
      %1267 = vdwg.mxu0
      %1268 = vmatprep.subr.bf16.mxu0 0
      %1269 = vmatpush1.bf16.msra.mxu0 %v892
      %1270 = vmatprep.subr.bf16.mxu0 0
      %1271 = vmatpush1.bf16.msra.mxu0 %v893
      %1272 = vmatprep.subr.bf16.mxu0 0
      %1273 = vmatpush1.bf16.msra.mxu0 %v894
      %1274 = vmatprep.subr.bf16.mxu0 0
      %1275 = vmatpush1.bf16.msra.mxu0 %v895
      %1276 = vmatprep.subr.bf16.mxu0 0
      %1277 = vmatpush1.bf16.msra.mxu0 %v896
      %1278 = vmatprep.subr.bf16.mxu0 0
      %1279 = vmatpush1.bf16.msra.mxu0 %v897
      %1280 = vmatprep.subr.bf16.mxu0 0
      %1281 = vmatpush1.bf16.msra.mxu0 0
      %1282 = vmatprep.subr.bf16.mxu0 0
      %1283 = vmatpush1.bf16.msra.mxu0 0
      %1284 = vmatprep.subr.bf16.mxu0 0
      %1285 = vmatpush1.bf16.msra.mxu0 0
      %1286 = vmatprep.subr.bf16.mxu0 0
      %1287 = vmatpush1.bf16.msra.mxu0 0
      %1288 = vmatprep.subr.bf16.mxu0 0
      %1289 = vmatpush1.bf16.msra.mxu0 0
      %1290 = vmatprep.subr.bf16.mxu0 0
      %1291 = vmatpush1.bf16.msra.mxu0 0
      %1292 = vmatprep.subr.bf16.mxu0 0
      %1293 = vmatpush1.bf16.msra.mxu0 0
      %1294 = vmatprep.subr.bf16.mxu0 0
      %1295 = vmatpush1.bf16.msra.mxu0 0
      %1296 = vmatprep.subr.bf16.mxu0 0
      %1297 = vmatpush1.bf16.msra.mxu0 0
      %1298 = vmatprep.subr.bf16.mxu0 0
      %1299 = vmatpush1.bf16.msra.mxu0 0
      %1300 = vmatprep.mubr.bf16.mxu0 0
      %1301 = vmatmul.mubr.bf16.gmra.mrb[0].mxu0 %v954
      %v1302 = vpop.f32.mrb[0].mxu0
      %v1303 = vadd.f32 %v1206, %v1302
      %v1304 = vpop.f32.mrb[0].mxu0
      %v1305 = vpop.f32.mrb[0].mxu0
      %v1306 = vadd.f32 %v1209, %v1305
      %v1307 = vpop.f32.mrb[0].mxu0
      %1308 = vmatprep.mubr.bf16.mxu0 0
      %1309 = vmatmul.mubr.bf16.gmra.mrb[0].mxu0 %v957
      %v1310 = vpop.f32.mrb[0].mxu0
      %v1311 = vadd.f32 %v1214, %v1310
      %v1312 = vpop.f32.mrb[0].mxu0
      %v1313 = vpop.f32.mrb[0].mxu0
      %v1314 = vadd.f32 %v1217, %v1313
      %v1315 = vpop.f32.mrb[0].mxu0
      %1316 = vmatprep.mubr.bf16.mxu0 0
      %1317 = vmatmul.mubr.bf16.gmra.mrb[0].mxu0 %v960
      %v1318 = vpop.f32.mrb[0].mxu0
      %v1319 = vadd.f32 %v1222, %v1318
      %v1320 = vpop.f32.mrb[0].mxu0
      %v1321 = vpop.f32.mrb[0].mxu0
      %v1322 = vadd.f32 %v1225, %v1321
      %v1323 = vpop.f32.mrb[0].mxu0
      %1324 = vmatprep.mubr.bf16.mxu0 0
      %1325 = vmatmul.mubr.bf16.gmra.mrb[0].mxu0 %v963
      %v1326 = vpop.f32.mrb[0].mxu0
      %v1327 = vadd.f32 %v1230, %v1326
      %v1328 = vpop.f32.mrb[0].mxu0
      %v1329 = vpop.f32.mrb[0].mxu0
      %v1330 = vadd.f32 %v1233, %v1329
      %v1331 = vpop.f32.mrb[0].mxu0
      %1332 = vmatprep.mubr.bf16.mxu0 0
      %1333 = vmatmul.mubr.bf16.gmra.mrb[0].mxu0 %v966
      %v1334 = vpop.f32.mrb[0].mxu0
      %v1335 = vadd.f32 %v1238, %v1334
      %v1336 = vpop.f32.mrb[0].mxu0
      %v1337 = vpop.f32.mrb[0].mxu0
      %v1338 = vadd.f32 %v1241, %v1337
      %v1339 = vpop.f32.mrb[0].mxu0
      %1340 = vmatprep.mubr.bf16.mxu0 0
      %1341 = vmatmul.mubr.bf16.gmra.mrb[0].mxu0 %v969
      %v1342 = vpop.f32.mrb[0].mxu0
      %v1343 = vadd.f32 %v1246, %v1342
      %v1344 = vpop.f32.mrb[0].mxu0
      %v1345 = vpop.f32.mrb[0].mxu0
      %v1346 = vadd.f32 %v1249, %v1345
      %v1347 = vpop.f32.mrb[0].mxu0
      %1348 = vmatprep.mubr.bf16.mxu0 0
      %1349 = vmatmul.mubr.bf16.gmra.mrb[0].mxu0 %v972
      %v1350 = vpop.f32.mrb[0].mxu0
      %v1351 = vadd.f32 %v1254, %v1350
      %v1352 = vpop.f32.mrb[0].mxu0
      %v1353 = vpop.f32.mrb[0].mxu0
      %v1354 = vadd.f32 %v1257, %v1353
      %v1355 = vpop.f32.mrb[0].mxu0
      %1356 = vmatprep.mubr.bf16.mxu0 0
      %1357 = vmatmul.mubr.bf16.gmra.mrb[0].mxu0 %v975
      %v1358 = vpop.f32.mrb[0].mxu0
      %v1359 = vadd.f32 %v1262, %v1358
      %v1360 = vpop.f32.mrb[0].mxu0
      %v1361 = vpop.f32.mrb[0].mxu0
      %v1362 = vadd.f32 %v1265, %v1361
      %v1363 = vpop.f32.mrb[0].mxu0
      %1364 = vdwg.mxu0
      %vm1365 = vcmask 64512
      %1366 = vst.msk [vmem:[%s174] sm:$0xff] %vm1365, %v1303
      %1367 = vst.msk [vmem:[%s174 + $0x8] sm:$0xff] %vm1365, %v1306
      %1368 = vst.msk [vmem:[%s174 + $0x10] sm:$0xff] %vm1365, %v1311
      %1369 = vst.msk [vmem:[%s174 + $0x18] sm:$0xff] %vm1365, %v1314
      %1370 = vst.msk [vmem:[%s174 + $0x20] sm:$0xff] %vm1365, %v1319
      %1371 = vst.msk [vmem:[%s174 + $0x28] sm:$0xff] %vm1365, %v1322
      %1372 = vst.msk [vmem:[%s174 + $0x30] sm:$0xff] %vm1365, %v1327
      %1373 = vst.msk [vmem:[%s174 + $0x38] sm:$0xff] %vm1365, %v1330
      %1374 = vst.msk [vmem:[%s174 + $0x40] sm:$0xff] %vm1365, %v1335
      %1375 = vst.msk [vmem:[%s174 + $0x48] sm:$0xff] %vm1365, %v1338
      %1376 = vst.msk [vmem:[%s174 + $0x50] sm:$0xff] %vm1365, %v1343
      %1377 = vst.msk [vmem:[%s174 + $0x58] sm:$0xff] %vm1365, %v1346
      %1378 = vst.msk [vmem:[%s174 + $0x60] sm:$0xff] %vm1365, %v1351
      %1379 = vst.msk [vmem:[%s174 + $0x68] sm:$0xff] %vm1365, %v1354
      %1380 = vst.msk [vmem:[%s174 + $0x70] sm:$0xff] %vm1365, %v1359
      %1381 = vst.msk [vmem:[%s174 + $0x78] sm:$0xff] %vm1365, %v1362
      %p1382 = scmp.lt.s32.totalorder %s17, 1
      %s1383 = scalar_select %p1382, %s17, 1
      %p1384 = scmp.lt.s32.totalorder %s18, 0
      %s1385 = scalar_select %p1384, %s18, 0
      %s1386 = smul.addr %s1383, 16
      %s1387 = sadd.s32 %s1385, %s1386
      %s1388 = smul.addr %s1387, 8
      %s1389 = scalar_lea.vmem %s2, %s1388
      // Predicated region
      $region29: #{_lambda_.1} parent=27 // pred_check
        %p1390 = pneg %p94
      $region30: #{_lambda_.1} parent=27 // pred_check_branch
        %1392 = sbr.rel (%p1390) target = $region32
      $region31: #{_lambda_.1} parent=27 // pred_region
        _
      $region32: #{_lambda_.1} parent=27 // pred_fallthru
        _
    $region28: #{_lambda_.1} parent=5 // pred_fallthru
      _
    %p1393 = scmp.le.s32.totalorder 2, %s8
    // Predicated region
    $region33: #{_lambda_.1} parent=5 // pred_check
      %p1394 = pneg %p1393
    $region34: #{_lambda_.1} parent=5 // pred_check_branch
      %1396 = sbr.rel (%p1394) target = $region36
    $region35: #{_lambda_.1} parent=5 // pred_region
      %s1397 = ssub.s32 %s8, 2
      // Predicated region
      $region37: #{_lambda_.1} parent=35 // pred_check
        %p1398 = pneg %p100
      $region38: #{_lambda_.1} parent=35 // pred_check_branch
        %1400 = sbr.rel (%p1398) target = $region40
      $region39: #{_lambda_.1} parent=35 // pred_region
        %p1401 = scmp.lt.s32.totalorder %s19, 1
        %s1402 = scalar_select %p1401, %s19, 1
        %p1403 = scmp.lt.s32.totalorder %s20, 0
        %s1404 = scalar_select %p1403, %s20, 0
        %s1405 = smul.addr %s1402, 16
        %s1406 = sadd.s32 %s1404, %s1405
        %s1407 = smul.addr %s1406, 8
        %s1408 = scalar_lea.vmem %s2, %s1407
      $region40: #{_lambda_.1} parent=35 // pred_fallthru
        _
    $region36: #{_lambda_.1} parent=5 // pred_fallthru
      _
  $region6: #{_lambda_.1} parent=0 // loop_footer
    %s12 = sadd.s32 1, %s8
  $region7: #{_lambda_.1} parent=0 // loop_footer_branch
    %7 = sbr.rel target = $region3
  $region8: #{_lambda_.1} parent=0 // loop_exit
    _

</llo_original>
